<compile_context>
chip_gen: v7x
topology: tpu7x:2x2x1
jax: 0.10.0
libtpu: 0.0.40
codegen_flags: <defaults>
</compile_context>

<pallas_src>
import functools

import numpy as np
import jax
import jax.numpy as jnp
from jax.experimental import pallas as pl
from jax.experimental.pallas import tpu as pltpu


# ----------------------------------------------------------------------------
# In-kernel helper: complex 2-D DFT of a block of Bb images via 2 fused matmuls
# ----------------------------------------------------------------------------
def _cdft2_block(xr_list, xi_list, a_big, b_big, compute_dtype):
    """xr_list/xi_list: Bb arrays (H, W) f32.  a_big: (2H,2H), b_big: (2W,2W).

    Returns (yr_list, yi_list) of Bb arrays (H, W) f32.
    """
    bb = len(xr_list)
    H, W = xr_list[0].shape

    # ---- left DFT: one (2H, 2H) @ (2H, Bb*W) matmul --------------------------
    xs = jnp.concatenate(
        [jnp.concatenate(xr_list, axis=1),      # (H, Bb*W)  real parts
         jnp.concatenate(xi_list, axis=1)],     # (H, Bb*W)  imag parts
        axis=0).astype(compute_dtype)           # (2H, Bb*W)
    t = jnp.dot(a_big, xs, preferred_element_type=jnp.float32)   # (2H, Bb*W) f32

    # ---- right DFT: one (Bb*H, 2W) @ (2W, 2W) matmul -------------------------
    t2 = jnp.concatenate(
        [jnp.concatenate([t[:H, b * W:(b + 1) * W],
                          t[H:, b * W:(b + 1) * W]], axis=1)     # (H, 2W)
         for b in range(bb)],
        axis=0).astype(compute_dtype)                            # (Bb*H, 2W)
    y2 = jnp.dot(t2, b_big, preferred_element_type=jnp.float32)  # (Bb*H, 2W) f32

    yr = [y2[b * H:(b + 1) * H, :W] for b in range(bb)]
    yi = [y2[b * H:(b + 1) * H, W:] for b in range(bb)]
    return yr, yi


# ----------------------------------------------------------------------------
# Kernels
# ----------------------------------------------------------------------------
def _fwd_adj_kernel(x_ref, a_ref, b_ref, m_ref, o_ref, *,
                    bb, mask_first, compute_dtype):
    m = m_ref[...]                                  # (H, W) f32
    xr, xi = [], []
    for b in range(bb):
        r = x_ref[b, 0, :, :]
        i = x_ref[b, 1, :, :]
        if mask_first:                              # adjoint: mask k-space first
            r = r * m
            i = i * m
        xr.append(r)
        xi.append(i)

    yr, yi = _cdft2_block(xr, xi, a_ref[...], b_ref[...], compute_dtype)

    for b in range(bb):
        r, i = yr[b], yi[b]
        if not mask_first:                          # forward: mask after the DFT
            r = r * m
            i = i * m
        o_ref[b, 0, :, :] = r
        o_ref[b, 1, :, :] = i


def _normal_kernel(x_ref, fa_ref, fb_ref, ia_ref, ib_ref, m_ref, o_ref, *,
                   bb, compute_dtype):
    m = m_ref[...]
    xr = [x_ref[b, 0, :, :] for b in range(bb)]
    xi = [x_ref[b, 1, :, :] for b in range(bb)]

    kr, ki = _cdft2_block(xr, xi, fa_ref[...], fb_ref[...], compute_dtype)
    # Mask applied by forward() and again by adjoint(): (k*m)*m, exact match.
    kr = [(k * m) * m for k in kr]
    ki = [(k * m) * m for k in ki]
    yr, yi = _cdft2_block(kr, ki, ia_ref[...], ib_ref[...], compute_dtype)

    for b in range(bb):
        o_ref[b, 0, :, :] = yr[b]
        o_ref[b, 1, :, :] = yi[b]


# ----------------------------------------------------------------------------
# pallas_call builders
# ----------------------------------------------------------------------------
def _pick_batch_block(B):
    # Keep exactly two parallel grid steps when possible (v7x has 2 TCs); each
    # step fuses its whole batch block into the two big matmuls.
    if B >= 2 and B % 2 == 0:
        return B // 2
    return 1


def _vmem_limit(bb, H, W, mat_bytes):
    io_bytes = 2 * bb * 2 * H * W * 4                 # x block + out block
    scratch = 8 * bb * (2 * H) * (2 * W) * 4          # intermediates / copies
    est = 2 * io_bytes + 2 * mat_bytes + H * W * 4 + scratch
    est = max(2 * est, 8 << 20)                       # headroom
    return int(min(est, 48 << 20))                    # stay inside v7x's 64 MiB


def _fwd_adj_call(x, a_big, b_big, mask, *, mask_first, compute_dtype):
    B, C, H, W = x.shape
    assert C == 2
    bb = _pick_batch_block(B)
    grid = (B // bb,)
    kernel = functools.partial(_fwd_adj_kernel, bb=bb, mask_first=mask_first,
                               compute_dtype=compute_dtype)
    mat_bytes = int((a_big.size + b_big.size) * a_big.dtype.itemsize)
    flops = int(8 * B * H * W * (H + W))
    bytes_accessed = int(2 * x.size * 4 + mat_bytes + mask.size * 4)
    return pl.pallas_call(
        kernel,
        out_shape=jax.ShapeDtypeStruct((B, 2, H, W), jnp.float32),
        grid=grid,
        in_specs=[
            pl.BlockSpec((bb, 2, H, W), lambda g: (g, 0, 0, 0)),   # x block
            pl.BlockSpec((2 * H, 2 * H), lambda g: (0, 0)),        # left DFT
            pl.BlockSpec((2 * W, 2 * W), lambda g: (0, 0)),        # right DFT
            pl.BlockSpec((H, W), lambda g: (0, 0)),                # mask
        ],
        out_specs=pl.BlockSpec((bb, 2, H, W), lambda g: (g, 0, 0, 0)),
        compiler_params=pltpu.CompilerParams(
            dimension_semantics=("parallel",),
            vmem_limit_bytes=_vmem_limit(bb, H, W, mat_bytes)),
        cost_estimate=pl.CostEstimate(flops=flops, transcendentals=0,
                                      bytes_accessed=bytes_accessed),
    )(x, a_big, b_big, mask)


def _normal_call(x, fa, fb, ia, ib, mask, *, compute_dtype):
    B, C, H, W = x.shape
    assert C == 2
    bb = _pick_batch_block(B)
    grid = (B // bb,)
    kernel = functools.partial(_normal_kernel, bb=bb, compute_dtype=compute_dtype)
    mat_bytes = int((fa.size + fb.size + ia.size + ib.size) * fa.dtype.itemsize)
    flops = int(16 * B * H * W * (H + W))
    bytes_accessed = int(2 * x.size * 4 + mat_bytes + mask.size * 4)
    return pl.pallas_call(
        kernel,
        out_shape=jax.ShapeDtypeStruct((B, 2, H, W), jnp.float32),
        grid=grid,
        in_specs=[
            pl.BlockSpec((bb, 2, H, W), lambda g: (g, 0, 0, 0)),   # x block
            pl.BlockSpec((2 * H, 2 * H), lambda g: (0, 0)),        # fwd left DFT
            pl.BlockSpec((2 * W, 2 * W), lambda g: (0, 0)),        # fwd right DFT
            pl.BlockSpec((2 * H, 2 * H), lambda g: (0, 0)),        # inv left DFT
            pl.BlockSpec((2 * W, 2 * W), lambda g: (0, 0)),        # inv right DFT
            pl.BlockSpec((H, W), lambda g: (0, 0)),                # mask
        ],
        out_specs=pl.BlockSpec((bb, 2, H, W), lambda g: (g, 0, 0, 0)),
        compiler_params=pltpu.CompilerParams(
            dimension_semantics=("parallel",),
            vmem_limit_bytes=_vmem_limit(bb, H, W, mat_bytes)),
        cost_estimate=pl.CostEstimate(flops=flops, transcendentals=0,
                                      bytes_accessed=bytes_accessed),
    )(x, fa, fb, ia, ib, mask)


# ----------------------------------------------------------------------------
# The wrapped operator A (single-coil masked Fourier encoding)
# ----------------------------------------------------------------------------
def _dft_factors(n):
    k = np.arange(n)
    ang = -2.0 * np.pi * np.outer(k, k) / n
    scale = 1.0 / np.sqrt(n)                   # orthonormal normalization
    return ((np.cos(ang) * scale).astype(np.float32),
            (np.sin(ang) * scale).astype(np.float32))


class MaskedFourierEncoding:
    """A(x): mask ⊙ FFT2(x);  A(x, adjoint=True): IFFT2(mask ⊙ x)."""

    def __init__(self, mask, compute_dtype=jnp.bfloat16):
        mask = jnp.asarray(mask, jnp.float32)
        H, W = mask.shape
        self.mask = mask
        self.compute_dtype = compute_dtype
        fhr, fhi = _dft_factors(H)
        fwr, fwi = _dft_factors(W)
        # "Realified" complex-matmul matrices (one MXU matmul per DFT stage).
        self.fa = jnp.asarray(np.block([[fhr, -fhi], [fhi, fhr]]), compute_dtype)
        self.fb = jnp.asarray(np.block([[fwr, fwi], [-fwi, fwr]]), compute_dtype)
        # Inverse (adjoint) orthonormal DFT = conjugate of the forward DFT.
        self.ia = jnp.asarray(np.block([[fhr, fhi], [-fhi, fhr]]), compute_dtype)
        self.ib = jnp.asarray(np.block([[fwr, -fwi], [fwi, fwr]]), compute_dtype)

    def __call__(self, x, adjoint=False):
        # x: (B, 2, H, W) float32 — channel 0 = real, channel 1 = imag
        if adjoint:
            return _fwd_adj_call(x, self.ia, self.ib, self.mask,
                                 mask_first=True, compute_dtype=self.compute_dtype)
        return _fwd_adj_call(x, self.fa, self.fb, self.mask,
                             mask_first=False, compute_dtype=self.compute_dtype)

    def normal(self, x):
        # Fused adjoint(forward(x)) in a single pallas_call (hot CG path).
        return _normal_call(x, self.fa, self.fb, self.ia, self.ib, self.mask,
                            compute_dtype=self.compute_dtype)


# ----------------------------------------------------------------------------
# Faithful port of the PyTorch `Operator` wrapper
# ----------------------------------------------------------------------------
class Operator:
    def __init__(self, A):
        self.operator = A

    def forward(self, x):
        return self.operator(x)

    def adjoint(self, x):
        return self.operator(x, adjoint=True)

    def normal(self, x):
        # Same math as adjoint(forward(x)); use the fused single-kernel path
        # when the wrapped operator provides it.
        if hasattr(self.operator, "normal"):
            return self.operator.normal(x)
        return self.adjoint(self.forward(x))


# ----------------------------------------------------------------------------
# Demo / correctness check
# ----------------------------------------------------------------------------
if __name__ == "__main__":
    B, H, W = 2, 16, 16

    key = jax.random.PRNGKey(0)
    x = jax.random.normal(key, (B, 2, H, W), dtype=jnp.float32)

    # Deterministic undersampling mask: every 3rd row + low-frequency rows.
    mask_np = np.zeros((H, W), dtype=np.float32)
    mask_np[::3, :] = 1.0
    mask_np[H // 2 - 2:H // 2 + 2, :] = 1.0
    mask = jnp.asarray(mask_np)

    # Reference (complex FFT in numpy).
    xc = np.asarray(x[:, 0]) + 1j * np.asarray(x[:, 1])
    k_ref = np.fft.fft2(xc, norm="ortho") * mask_np
    fwd_ref = np.stack([k_ref.real, k_ref.imag], axis=1)
    img_ref = np.fft.ifft2(k_ref * mask_np, norm="ortho")
    adj_ref = np.stack([img_ref.real, img_ref.imag], axis=1)

    # --- f32-compute instance: tight tolerance (algorithmic correctness) ----
    op32 = Operator(MaskedFourierEncoding(mask, compute_dtype=jnp.float32))
    y_fwd = jax.block_until_ready(op32.forward(x))
    y_adj = jax.block_until_ready(op32.adjoint(y_fwd))
    y_nrm = jax.block_until_ready(op32.normal(x))
    assert np.allclose(np.asarray(y_fwd), fwd_ref, atol=1e-4)
    assert np.allclose(np.asarray(y_adj), adj_ref, atol=1e-4)
    assert np.allclose(np.asarray(y_nrm), adj_ref, atol=1e-4)

    # --- default (bf16 MXU operands, f32 accumulation): re-baselined tol ----
    op16 = Operator(MaskedFourierEncoding(mask))
    z_fwd = jax.block_until_ready(op16.forward(x))
    z_adj = jax.block_until_ready(op16.adjoint(y_fwd))
    z_nrm = jax.block_until_ready(op16.normal(x))
    assert np.allclose(np.asarray(z_fwd), fwd_ref, atol=3e-1)
    assert np.allclose(np.asarray(z_adj), adj_ref, atol=3e-1)
    assert np.allclose(np.asarray(z_nrm), adj_ref, atol=3e-1)
    assert z_fwd.shape == (B, 2, H, W) and z_nrm.dtype == jnp.float32

    print("KERNEL_OK")
</pallas_src>

<mosaic_0001>
module attributes {stable_mosaic.version = 11 : i64} {
  func.func @_fwd_adj_kernel(%arg0: i32, %arg1: memref<1x2x16x16xf32, #tpu.memory_space<vmem>>, %arg2: memref<32x32xf32, #tpu.memory_space<vmem>>, %arg3: memref<32x32xf32, #tpu.memory_space<vmem>>, %arg4: memref<16x16xf32, #tpu.memory_space<vmem>>, %arg5: memref<1x2x16x16xf32, #tpu.memory_space<vmem>>) attributes {dimension_semantics = [#tpu.dimension_semantics<parallel>], iteration_bounds = array<i64: 2>, scalar_prefetch = 0 : i64, scratch_operands = 0 : i64, tpu.core_type = #tpu.core_type<tc>, window_params = [{transform_indices = @transform_0, window_bounds = array<i64: 1, 2, 16, 16>}, {pipeline_mode = #tpu.pipeline_mode<synchronous>, transform_indices = @transform_1, window_bounds = array<i64: 32, 32>}, {pipeline_mode = #tpu.pipeline_mode<synchronous>, transform_indices = @transform_2, window_bounds = array<i64: 32, 32>}, {pipeline_mode = #tpu.pipeline_mode<synchronous>, transform_indices = @transform_3, window_bounds = array<i64: 16, 16>}, {transform_indices = @transform_4, window_bounds = array<i64: 1, 2, 16, 16>}]} {
    %c0 = arith.constant 0 : index
    %c0_0 = arith.constant 0 : index
    %0 = vector.load %arg4[%c0, %c0_0] : memref<16x16xf32, #tpu.memory_space<vmem>>, vector<16x16xf32>
    %c0_1 = arith.constant 0 : index
    %c0_2 = arith.constant 0 : index
    %c0_3 = arith.constant 0 : index
    %c0_4 = arith.constant 0 : index
    %1 = vector.load %arg1[%c0_1, %c0_2, %c0_3, %c0_4] : memref<1x2x16x16xf32, #tpu.memory_space<vmem>>, vector<1x1x16x16xf32>
    %2 = vector.shape_cast %1 : vector<1x1x16x16xf32> to vector<16x16xf32>
    %c0_5 = arith.constant 0 : index
    %c1 = arith.constant 1 : index
    %c0_6 = arith.constant 0 : index
    %c0_7 = arith.constant 0 : index
    %3 = vector.load %arg1[%c0_5, %c1, %c0_6, %c0_7] : memref<1x2x16x16xf32, #tpu.memory_space<vmem>>, vector<1x1x16x16xf32>
    %4 = vector.shape_cast %3 : vector<1x1x16x16xf32> to vector<16x16xf32>
    %c0_8 = arith.constant 0 : index
    %c0_9 = arith.constant 0 : index
    %5 = vector.load %arg2[%c0_8, %c0_9] : memref<32x32xf32, #tpu.memory_space<vmem>>, vector<32x32xf32>
    %c0_10 = arith.constant 0 : index
    %c0_11 = arith.constant 0 : index
    %6 = vector.load %arg3[%c0_10, %c0_11] : memref<32x32xf32, #tpu.memory_space<vmem>>, vector<32x32xf32>
    %7 = tpu.concatenate %2, %4 in 0 : vector<16x16xf32>, vector<16x16xf32> -> vector<32x16xf32>
    %cst = arith.constant dense<0.000000e+00> : vector<32x16xf32>
    %8 = tpu.matmul %5, %7, %cst {dimension_numbers = #tpu.dot_dimension_numbers<[1], [0], [0], [1], [0, 0, 1, 1], [], []>} : vector<32x32xf32>, vector<32x16xf32>, vector<32x16xf32> -> vector<32x16xf32>
    %9 = vector.extract_strided_slice %8 {offsets = [0, 0], sizes = [16, 16], strides = [1, 1]} : vector<32x16xf32> to vector<16x16xf32>
    %10 = vector.extract_strided_slice %8 {offsets = [16, 0], sizes = [16, 16], strides = [1, 1]} : vector<32x16xf32> to vector<16x16xf32>
    %11 = tpu.concatenate %9, %10 in 1 : vector<16x16xf32>, vector<16x16xf32> -> vector<16x32xf32>
    %cst_12 = arith.constant dense<0.000000e+00> : vector<16x32xf32>
    %12 = tpu.matmul %11, %6, %cst_12 {dimension_numbers = #tpu.dot_dimension_numbers<[1], [0], [0], [1], [0, 0, 1, 1], [], []>} : vector<16x32xf32>, vector<32x32xf32>, vector<16x32xf32> -> vector<16x32xf32>
    %13 = vector.extract_strided_slice %12 {offsets = [0, 0], sizes = [16, 16], strides = [1, 1]} : vector<16x32xf32> to vector<16x16xf32>
    %14 = vector.extract_strided_slice %12 {offsets = [0, 16], sizes = [16, 16], strides = [1, 1]} : vector<16x32xf32> to vector<16x16xf32>
    %15 = arith.mulf %13, %0 : vector<16x16xf32>
    %16 = arith.mulf %14, %0 : vector<16x16xf32>
    %c0_13 = arith.constant 0 : index
    %c0_14 = arith.constant 0 : index
    %c0_15 = arith.constant 0 : index
    %c0_16 = arith.constant 0 : index
    %17 = vector.load %arg5[%c0_13, %c0_14, %c0_15, %c0_16] : memref<1x2x16x16xf32, #tpu.memory_space<vmem>>, vector<1x1x16x16xf32>
    %18 = vector.shape_cast %17 : vector<1x1x16x16xf32> to vector<16x16xf32>
    %19 = vector.shape_cast %15 : vector<16x16xf32> to vector<1x1x16x16xf32>
    tpu.vector_store %arg5[%c0_13, %c0_14, %c0_15, %c0_16], %19 {strides = array<i32>} : memref<1x2x16x16xf32, #tpu.memory_space<vmem>>, vector<1x1x16x16xf32>,
    %c0_17 = arith.constant 0 : index
    %c1_18 = arith.constant 1 : index
    %c0_19 = arith.constant 0 : index
    %c0_20 = arith.constant 0 : index
    %20 = vector.load %arg5[%c0_17, %c1_18, %c0_19, %c0_20] : memref<1x2x16x16xf32, #tpu.memory_space<vmem>>, vector<1x1x16x16xf32>
    %21 = vector.shape_cast %20 : vector<1x1x16x16xf32> to vector<16x16xf32>
    %22 = vector.shape_cast %16 : vector<16x16xf32> to vector<1x1x16x16xf32>
    tpu.vector_store %arg5[%c0_17, %c1_18, %c0_19, %c0_20], %22 {strides = array<i32>} : memref<1x2x16x16xf32, #tpu.memory_space<vmem>>, vector<1x1x16x16xf32>,
    return
  }
  func.func @transform_0(%arg0: i32) -> (i32, i32, i32, i32) {
    %c0_i32 = arith.constant 0 : i32
    %c0_i32_0 = arith.constant 0 : i32
    %c0_i32_1 = arith.constant 0 : i32
    %c0_i32_2 = arith.constant 0 : i32
    return %arg0, %c0_i32, %c0_i32_0, %c0_i32_1 : i32, i32, i32, i32
  }
  func.func @transform_1(%arg0: i32) -> (i32, i32) {
    %c0_i32 = arith.constant 0 : i32
    %c0_i32_0 = arith.constant 0 : i32
    %c0_i32_1 = arith.constant 0 : i32
    return %c0_i32, %c0_i32_0 : i32, i32
  }
  func.func @transform_2(%arg0: i32) -> (i32, i32) {
    %c0_i32 = arith.constant 0 : i32
    %c0_i32_0 = arith.constant 0 : i32
    %c0_i32_1 = arith.constant 0 : i32
    return %c0_i32, %c0_i32_0 : i32, i32
  }
  func.func @transform_3(%arg0: i32) -> (i32, i32) {
    %c0_i32 = arith.constant 0 : i32
    %c0_i32_0 = arith.constant 0 : i32
    %c0_i32_1 = arith.constant 0 : i32
    return %c0_i32, %c0_i32_0 : i32, i32
  }
  func.func @transform_4(%arg0: i32) -> (i32, i32, i32, i32) {
    %c0_i32 = arith.constant 0 : i32
    %c0_i32_0 = arith.constant 0 : i32
    %c0_i32_1 = arith.constant 0 : i32
    %c0_i32_2 = arith.constant 0 : i32
    return %arg0, %c0_i32, %c0_i32_0, %c0_i32_1 : i32, i32, i32, i32
  }
}

</mosaic_0001>

<llo_original>
// kernel: tpu_custom_call.1
$region0: #{tpu_custom_call.1}
  #allocation0 [shape = 'u32[]', space=smem, size = 0x4, offset = 0x4, fixed_abs, tag = 'smem constant byte address 0x4 - core index']
  #allocation1 [shape = 'u32[144,128]{1,0:T(1,128)}', space=vmem, size = 0x12000, scoped, tag = 'internal scratch']
  %s0 = inlined_call_operand.hbm [shape: f32[2,2,16,16], index: 0, kind: input, shape index: {}]
  %s1 = inlined_call_operand.hbm [shape: f32[32,32], index: 1, kind: input, shape index: {}]
  %s2 = inlined_call_operand.hbm [shape: f32[32,32], index: 2, kind: input, shape index: {}]
  %s3 = inlined_call_operand.hbm [shape: f32[16,16], index: 3, kind: input, shape index: {}]
  %s4 = inlined_call_operand.hbm [shape: f32[2,2,16,16], index: 4, kind: output, shape index: {}]
  %s5 = sld [smem:[#allocation0]]
  $region65: #{tpu_custom_call.1} parent=0
    _
  %s7 = ssub.s32 1, %s5
  %s8 = scalar_select 0, %s7, %s5
  $region1: #{tpu_custom_call.1} parent=0
    #allocation2 [shape = 'u8[32768]{0}', space=vmem, size = 0x8000, scoped, tag = 'input window, operand 0']
    #allocation3 [shape = 's32[2]{0}', space=sflag, size = 0x8, scoped, tag = 'scoped memory for tpu_custom_call.1']
    #allocation4 [shape = 's32[2]{0}', space=sflag, size = 0x8, scoped, tag = 'scoped memory for tpu_custom_call.1']
    #allocation5 [shape = 'u8[16384]{0}', space=vmem, size = 0x4000, scoped, tag = 'input window, operand 1, single buffered']
    #allocation6 [shape = 's32[1]{0}', space=sflag, size = 0x4, scoped, tag = 'scoped memory for tpu_custom_call.1']
    #allocation7 [shape = 'u8[16384]{0}', space=vmem, size = 0x4000, scoped, tag = 'input window, operand 2, single buffered']
    #allocation8 [shape = 'u8[8192]{0}', space=vmem, size = 0x2000, scoped, tag = 'input window, operand 3, single buffered']
    #allocation9 [shape = 's32[1]{0}', space=sflag, size = 0x4, scoped, tag = 'scoped memory for tpu_custom_call.1']
    #allocation10 [shape = 'u8[32768]{0}', space=vmem, size = 0x8000, scoped, tag = 'output window, operand 0']
    %9 = vsyncpa [#allocation3], 0
    %s10 = scalar_lea.sflag [#allocation3], 1
    %11 = vsyncpa %s10, 0
    %12 = vsyncpa [#allocation6], 0
    %13 = vsyncpa [#allocation9], 0
    %14 = vsyncpa [#allocation4], 0
    %s15 = scalar_lea.sflag [#allocation4], 1
    %16 = vsyncpa %s15, 0
    loop: start=0, step=1, limit=4
    $region2: #{tpu_custom_call.1} parent=1 // loop_pre_header
      _
    $region3: #{tpu_custom_call.1} parent=1 // loop_header
      %s18 = sphi 0, %s22
      %p19 = scmp.ge.s32.totalorder %s18, 4
      %s28 = sphi 0, %s30
      %s31 = sphi 0, %s28
      %s32 = sphi 0, %s31
      %s48 = sphi 0, %s32
      %s52 = sphi 0, %s52
      %s54 = sphi 0, %s52
      %s55 = sphi 0, %s54
      %s69 = sphi 0, %s55
      %s73 = sphi 0, %s73
      %s75 = sphi 0, %s73
      %s76 = sphi 0, %s75
      %s90 = sphi 0, %s76
      %s94 = sphi 0, %s94
      %s96 = sphi 0, %s94
      %s97 = sphi 0, %s96
      %s111 = sphi 0, %s97
      %s117 = sphi 0, %s119
      %s120 = sphi 0, %s117
      %s121 = sphi 0, %s120
      %s137 = sphi 0, %s121
    $region4: #{tpu_custom_call.1} parent=1 // loop_header_branch
      %21 = sbr.rel (%p19) target = $region8
    $region5: #{tpu_custom_call.1} parent=1 // loop_body
      %s23 = ssub.s32 %s18, 1
      %s24 = ssub.s32 %s18, 2
      %s25 = sadd.s32 %s18, 1
      %s26 = ssub.s32 %s18, %s25
      %p27 = scmp.eq.s32.totalorder %s26, 0
      %s29 = sadd.s32 %s28, 1
      %s30 = scalar_select %p27, %s28, %s29
      %p33 = pneg %p27
      %p34 = scmp.eq.s32.totalorder %s18, 1
      %p35 = por %p33, %p34
      %p36 = scmp.ne.s32.totalorder %s28, %s31
      %p37 = scmp.eq.s32.totalorder %s18, 0
      %p38 = por %p36, %p37
      %p39 = scmp.ne.s32.totalorder %s28, %s31
      %p40 = scmp.eq.s32.totalorder %s23, 1
      %p41 = por %p39, %p40
      %p42 = scmp.ne.s32.totalorder %s31, %s32
      %p43 = scmp.eq.s32.totalorder %s23, 0
      %p44 = por %p42, %p43
      %p45 = scmp.ne.s32.totalorder %s31, %s32
      %p46 = scmp.eq.s32.totalorder %s24, 1
      %p47 = por %p45, %p46
      %p49 = scmp.ne.s32.totalorder %s32, %s48
      %p50 = scmp.eq.s32.totalorder %s24, 0
      %p51 = por %p49, %p50
      %s53 = sadd.s32 %s52, 1
      %p56 = scmp.eq.s32.totalorder %s18, 1
      %p57 = scmp.ne.s32.totalorder %s52, %s54
      %p58 = scmp.eq.s32.totalorder %s18, 0
      %p59 = por %p57, %p58
      %p60 = scmp.ne.s32.totalorder %s52, %s54
      %p61 = scmp.eq.s32.totalorder %s23, 1
      %p62 = por %p60, %p61
      %p63 = scmp.ne.s32.totalorder %s54, %s55
      %p64 = scmp.eq.s32.totalorder %s23, 0
      %p65 = por %p63, %p64
      %p66 = scmp.ne.s32.totalorder %s54, %s55
      %p67 = scmp.eq.s32.totalorder %s24, 1
      %p68 = por %p66, %p67
      %p70 = scmp.ne.s32.totalorder %s55, %s69
      %p71 = scmp.eq.s32.totalorder %s24, 0
      %p72 = por %p70, %p71
      %s74 = sadd.s32 %s73, 1
      %p77 = scmp.eq.s32.totalorder %s18, 1
      %p78 = scmp.ne.s32.totalorder %s73, %s75
      %p79 = scmp.eq.s32.totalorder %s18, 0
      %p80 = por %p78, %p79
      %p81 = scmp.ne.s32.totalorder %s73, %s75
      %p82 = scmp.eq.s32.totalorder %s23, 1
      %p83 = por %p81, %p82
      %p84 = scmp.ne.s32.totalorder %s75, %s76
      %p85 = scmp.eq.s32.totalorder %s23, 0
      %p86 = por %p84, %p85
      %p87 = scmp.ne.s32.totalorder %s75, %s76
      %p88 = scmp.eq.s32.totalorder %s24, 1
      %p89 = por %p87, %p88
      %p91 = scmp.ne.s32.totalorder %s76, %s90
      %p92 = scmp.eq.s32.totalorder %s24, 0
      %p93 = por %p91, %p92
      %s95 = sadd.s32 %s94, 1
      %p98 = scmp.eq.s32.totalorder %s18, 1
      %p99 = scmp.ne.s32.totalorder %s94, %s96
      %p100 = scmp.eq.s32.totalorder %s18, 0
      %p101 = por %p99, %p100
      %p102 = scmp.ne.s32.totalorder %s94, %s96
      %p103 = scmp.eq.s32.totalorder %s23, 1
      %p104 = por %p102, %p103
      %p105 = scmp.ne.s32.totalorder %s96, %s97
      %p106 = scmp.eq.s32.totalorder %s23, 0
      %p107 = por %p105, %p106
      %p108 = scmp.ne.s32.totalorder %s96, %s97
      %p109 = scmp.eq.s32.totalorder %s24, 1
      %p110 = por %p108, %p109
      %p112 = scmp.ne.s32.totalorder %s97, %s111
      %p113 = scmp.eq.s32.totalorder %s24, 0
      %p114 = por %p112, %p113
      %s115 = ssub.s32 %s18, %s25
      %p116 = scmp.eq.s32.totalorder %s115, 0
      %s118 = sadd.s32 %s117, 1
      %s119 = scalar_select %p116, %s117, %s118
      %p122 = pneg %p116
      %p123 = scmp.eq.s32.totalorder %s18, 1
      %p124 = por %p122, %p123
      %p125 = scmp.ne.s32.totalorder %s117, %s120
      %p126 = scmp.eq.s32.totalorder %s18, 0
      %p127 = por %p125, %p126
      %p128 = scmp.ne.s32.totalorder %s117, %s120
      %p129 = scmp.eq.s32.totalorder %s23, 1
      %p130 = por %p128, %p129
      %p131 = scmp.ne.s32.totalorder %s120, %s121
      %p132 = scmp.eq.s32.totalorder %s23, 0
      %p133 = por %p131, %p132
      %p134 = scmp.ne.s32.totalorder %s120, %s121
      %p135 = scmp.eq.s32.totalorder %s24, 1
      %p136 = por %p134, %p135
      %p138 = scmp.ne.s32.totalorder %s121, %s137
      %p139 = scmp.eq.s32.totalorder %s24, 0
      %p140 = por %p138, %p139
      %p141 = scmp.le.s32.totalorder 1, %s18
      %p142 = scmp.lt.s32.totalorder %s18, 3
      %p143 = pnand %p141, %p142
      %p144 = pneg %p143
      // Predicated region
      $region9: #{tpu_custom_call.1} parent=5 // pred_check
        _
      $region10: #{tpu_custom_call.1} parent=5 // pred_check_branch
        %146 = sbr.rel (%p143) target = $region12
      $region11: #{tpu_custom_call.1} parent=5 // pred_region
        %s147 = ssub.s32 %s18, 1
        // Predicated region
        $region13: #{tpu_custom_call.1} parent=11 // pred_check
          %p148 = pneg %p65
        $region14: #{tpu_custom_call.1} parent=11 // pred_check_branch
          %150 = sbr.rel (%p148) target = $region16
        $region15: #{tpu_custom_call.1} parent=11 // pred_region
          %s152 = ssub.s32 512, 512
          %153 = vsyncadd [#allocation6], %s152
          %s154 = sshll.u32 [#allocation5], 4
          %s155 = int_to_ptr.vmem [resolvable:$true] %s154
          %160 = dma.hbm_to_vmem [thread:$0]  %s1, 512, %s155, [#allocation6], 128, 128, 8
        $region16: #{tpu_custom_call.1} parent=11 // pred_fallthru
          _
        // Predicated region
        $region17: #{tpu_custom_call.1} parent=11 // pred_check
          %p161 = pneg %p86
        $region18: #{tpu_custom_call.1} parent=11 // pred_check_branch
          %163 = sbr.rel (%p161) target = $region20
        $region19: #{tpu_custom_call.1} parent=11 // pred_region
          %s165 = ssub.s32 512, 512
          %166 = vsyncadd [#allocation6], %s165
          %s167 = sshll.u32 [#allocation7], 4
          %s168 = int_to_ptr.vmem [resolvable:$true] %s167
          %173 = dma.hbm_to_vmem [thread:$0]  %s2, 512, %s168, [#allocation6], 128, 128, 8
        $region20: #{tpu_custom_call.1} parent=11 // pred_fallthru
          _
        // Predicated region
        $region21: #{tpu_custom_call.1} parent=11 // pred_check
          %p174 = pneg %p107
        $region22: #{tpu_custom_call.1} parent=11 // pred_check_branch
          %176 = sbr.rel (%p174) target = $region24
        $region23: #{tpu_custom_call.1} parent=11 // pred_region
          %s178 = ssub.s32 256, 256
          %179 = vsyncadd [#allocation9], %s178
          %s180 = sshll.u32 [#allocation8], 4
          %s181 = int_to_ptr.vmem [resolvable:$true] %s180
          %186 = dma.hbm_to_vmem [thread:$0]  %s3, 256, %s181, [#allocation9], 128, 128, 8
        $region24: #{tpu_custom_call.1} parent=11 // pred_fallthru
          _
      $region12: #{tpu_custom_call.1} parent=5 // pred_fallthru
        _
      %p187 = scmp.lt.s32.totalorder %s18, 2
      // Predicated region
      $region25: #{tpu_custom_call.1} parent=5 // pred_check
        %p188 = pneg %p187
      $region26: #{tpu_custom_call.1} parent=5 // pred_check_branch
        %190 = sbr.rel (%p188) target = $region28
      $region27: #{tpu_custom_call.1} parent=5 // pred_region
        // Predicated region
        $region29: #{tpu_custom_call.1} parent=27 // pred_check
          %p191 = pneg %p38
        $region30: #{tpu_custom_call.1} parent=27 // pred_check_branch
          %193 = sbr.rel (%p191) target = $region32
        $region31: #{tpu_custom_call.1} parent=27 // pred_region
          %s194 = sand.u32 %s28, 1
          %s195 = scalar_lea.sflag [#allocation3], %s194
          %s196 = sand.u32 %s28, 1
          %s197 = smul.addr %s196, 32
          %s198 = scalar_lea.vmem [#allocation2], %s197
          %s200 = ssub.s32 512, 512
          %201 = vsyncadd %s195, %s200
          %s202 = smul.addr %s18, 4
          %s203 = smul.addr %s202, 128
          %s204 = scalar_lea.hbm %s0, %s203
          %s205 = sshll.u32 %s198, 4
          %s206 = int_to_ptr.vmem [resolvable:$true] %s205
          %211 = dma.hbm_to_vmem [thread:$0]  %s204, 512, %s206, %s195, 128, 128, 8
        $region32: #{tpu_custom_call.1} parent=27 // pred_fallthru
          _
      $region28: #{tpu_custom_call.1} parent=5 // pred_fallthru
        _
      %p212 = scmp.le.s32.totalorder 1, %s18
      %p213 = scmp.lt.s32.totalorder %s18, 3
      %p214 = pnand %p212, %p213
      %p215 = pneg %p214
      // Predicated region
      $region33: #{tpu_custom_call.1} parent=5 // pred_check
        _
      $region34: #{tpu_custom_call.1} parent=5 // pred_check_branch
        %217 = sbr.rel (%p214) target = $region36
      $region35: #{tpu_custom_call.1} parent=5 // pred_region
        %s218 = ssub.s32 %s18, 1
        %s219 = sand.u32 %s31, 1
        %s220 = scalar_lea.sflag [#allocation3], %s219
        %s221 = sand.u32 %s31, 1
        %s222 = smul.addr %s221, 32
        %s223 = scalar_lea.vmem [#allocation2], %s222
        // Predicated region
        $region37: #{tpu_custom_call.1} parent=35 // pred_check
          %p224 = pneg %p44
        $region38: #{tpu_custom_call.1} parent=35 // pred_check_branch
          %226 = sbr.rel (%p224) target = $region40
        $region39: #{tpu_custom_call.1} parent=35 // pred_region
          %227 = dma.done %s220, 512
        $region40: #{tpu_custom_call.1} parent=35 // pred_fallthru
          _
        // Predicated region
        $region41: #{tpu_custom_call.1} parent=35 // pred_check
          %p228 = pneg %p65
        $region42: #{tpu_custom_call.1} parent=35 // pred_check_branch
          %230 = sbr.rel (%p228) target = $region44
        $region43: #{tpu_custom_call.1} parent=35 // pred_region
          %231 = dma.done [#allocation6], 512
        $region44: #{tpu_custom_call.1} parent=35 // pred_fallthru
          _
        // Predicated region
        $region45: #{tpu_custom_call.1} parent=35 // pred_check
          %p232 = pneg %p86
        $region46: #{tpu_custom_call.1} parent=35 // pred_check_branch
          %234 = sbr.rel (%p232) target = $region48
        $region47: #{tpu_custom_call.1} parent=35 // pred_region
          %235 = dma.done [#allocation6], 512
        $region48: #{tpu_custom_call.1} parent=35 // pred_fallthru
          _
        // Predicated region
        $region49: #{tpu_custom_call.1} parent=35 // pred_check
          %p236 = pneg %p107
        $region50: #{tpu_custom_call.1} parent=35 // pred_check_branch
          %238 = sbr.rel (%p236) target = $region52
        $region51: #{tpu_custom_call.1} parent=35 // pred_region
          %239 = dma.done [#allocation9], 256
        $region52: #{tpu_custom_call.1} parent=35 // pred_fallthru
          _
        %s240 = sand.u32 %s31, 1
        %s241 = scalar_lea.sflag [#allocation3], %s240
        %s242 = sand.u32 %s31, 1
        %s243 = smul.addr %s242, 32
        %s244 = scalar_lea.vmem [#allocation2], %s243
        %p245 = pneg %p44
        %p246 = pneg %p41
        %p247 = pneg %p65
        %p248 = pneg %p62
        %p249 = pneg %p86
        %p250 = pneg %p83
        %p251 = pneg %p107
        %p252 = pneg %p104
        %p253 = pneg %p133
        %p254 = pneg %p130
        %s255 = sand.u32 %s120, 1
        %s256 = scalar_lea.sflag [#allocation4], %s255
        %s257 = sand.u32 %s120, 1
        %s258 = smul.addr %s257, 32
        %s259 = scalar_lea.vmem [#allocation10], %s258
        %v260 = vld [vmem:[#allocation8] sm:$0xff]
        %v261 = vld [vmem:[#allocation8 + $0x8] sm:$0xff]
        %v262 = vld [vmem:[%s223] sm:$0xff]
        %v263 = vld [vmem:[%s223 + $0x8] sm:$0xff]
        %s264 = scalar_lea.vmem %s223, 16 [#allocation2]
        %v265 = vld [vmem:[%s264] sm:$0xff]
        %v266 = vld [vmem:[%s264 + $0x8] sm:$0xff]
        %v267 = vld [vmem:[#allocation5] sm:$0xff]
        %v268 = vld [vmem:[#allocation5 + $0x8] sm:$0xff]
        %v269 = vld [vmem:[#allocation5 + $0x10] sm:$0xff]
        %v270 = vld [vmem:[#allocation5 + $0x18] sm:$0xff]
        %v271 = vld [vmem:[#allocation7] sm:$0xff]
        %v272 = vld [vmem:[#allocation7 + $0x8] sm:$0xff]
        %v273 = vld [vmem:[#allocation7 + $0x10] sm:$0xff]
        %v274 = vld [vmem:[#allocation7 + $0x18] sm:$0xff]
        %vm275 = vcmask 261120
        %v277 = vsel %vm275, %v267, 0
        %v280 = vsel %vm275, %v268, 0
        %v283 = vsel %vm275, %v269, 0
        %v286 = vsel %vm275, %v270, 0
        %288 = vmatprep.subr.mxu0 0.0
        %289 = vmatpush1.msra.mxu0 %v262
        %290 = vmatprep.subr.mxu0 0.0
        %291 = vmatpush1.msra.mxu0 %v263
        %292 = vmatprep.subr.mxu0 0.0
        %293 = vmatpush1.msra.mxu0 %v265
        %294 = vmatprep.subr.mxu0 0.0
        %295 = vmatpush1.msra.mxu0 %v266
        %296 = vmatprep.subr.mxu0 0.0
        %297 = vmatpush1.msra.mxu0 0.0
        %298 = vmatprep.subr.mxu0 0.0
        %299 = vmatpush1.msra.mxu0 0.0
        %300 = vmatprep.subr.mxu0 0.0
        %301 = vmatpush1.msra.mxu0 0.0
        %302 = vmatprep.subr.mxu0 0.0
        %303 = vmatpush1.msra.mxu0 0.0
        %304 = vmatprep.subr.mxu0 0.0
        %305 = vmatpush1.msra.mxu0 0.0
        %306 = vmatprep.subr.mxu0 0.0
        %307 = vmatpush1.msra.mxu0 0.0
        %308 = vmatprep.subr.mxu0 0.0
        %309 = vmatpush1.msra.mxu0 0.0
        %310 = vmatprep.subr.mxu0 0.0
        %311 = vmatpush1.msra.mxu0 0.0
        %312 = vmatprep.subr.mxu0 0.0
        %313 = vmatpush1.msra.mxu0 0.0
        %314 = vmatprep.subr.mxu0 0.0
        %315 = vmatpush1.msra.mxu0 0.0
        %316 = vmatprep.subr.mxu0 0.0
        %317 = vmatpush1.msra.mxu0 0.0
        %318 = vmatprep.subr.mxu0 0.0
        %319 = vmatpush1.msra.mxu0 0.0
        %320 = vmatprep.subr.mxu0 0.0
        %321 = vmatpush1.msra.mxu0 0.0
        %322 = vmatprep.subr.mxu0 0.0
        %323 = vmatpush1.msra.mxu0 0.0
        %324 = vmatprep.subr.mxu0 0.0
        %325 = vmatpush1.msra.mxu0 0.0
        %326 = vmatprep.subr.mxu0 0.0
        %327 = vmatpush1.msra.mxu0 0.0
        %328 = vmatprep.subr.mxu0 0.0
        %329 = vmatpush1.msra.mxu0 0.0
        %330 = vmatprep.subr.mxu0 0.0
        %331 = vmatpush1.msra.mxu0 0.0
        %332 = vmatprep.subr.mxu0 0.0
        %333 = vmatpush1.msra.mxu0 0.0
        %334 = vmatprep.subr.mxu0 0.0
        %335 = vmatpush1.msra.mxu0 0.0
        %336 = vmatprep.subr.mxu0 0.0
        %337 = vmatpush1.msra.mxu0 0.0
        %338 = vmatprep.subr.mxu0 0.0
        %339 = vmatpush1.msra.mxu0 0.0
        %340 = vmatprep.subr.mxu0 0.0
        %341 = vmatpush1.msra.mxu0 0.0
        %342 = vmatprep.subr.mxu0 0.0
        %343 = vmatpush1.msra.mxu0 0.0
        %344 = vmatprep.subr.mxu0 0.0
        %345 = vmatpush1.msra.mxu0 0.0
        %346 = vmatprep.subr.mxu0 0.0
        %347 = vmatpush1.msra.mxu0 0.0
        %348 = vmatprep.subr.mxu0 0.0
        %349 = vmatpush1.msra.mxu0 0.0
        %350 = vmatprep.subr.mxu0 0.0
        %351 = vmatpush1.msra.mxu0 0.0
        %352 = vmatprep.mubr.f32.mxu0 0.0
        %353 = vmatmul.mubr.f32.gmra.mrb[0].mxu0 %v277
        %v354 = vpop.f32.mrb[0].mxu0
        %v355 = vadd.f32 0.0, %v354
        %v356 = vpop.f32.mrb[0].mxu0
        %357 = vmatprep.mubr.f32.mxu0 0.0
        %358 = vmatmul.mubr.f32.gmra.mrb[0].mxu0 %v280
        %v359 = vpop.f32.mrb[0].mxu0
        %v360 = vadd.f32 0.0, %v359
        %v361 = vpop.f32.mrb[0].mxu0
        %362 = vmatprep.mubr.f32.mxu0 0.0
        %363 = vmatmul.mubr.f32.gmra.mrb[0].mxu0 %v283
        %v364 = vpop.f32.mrb[0].mxu0
        %v365 = vadd.f32 0.0, %v364
        %v366 = vpop.f32.mrb[0].mxu0
        %367 = vmatprep.mubr.f32.mxu0 0.0
        %368 = vmatmul.mubr.f32.gmra.mrb[0].mxu0 %v286
        %v369 = vpop.f32.mrb[0].mxu0
        %v370 = vadd.f32 0.0, %v369
        %v371 = vpop.f32.mrb[0].mxu0
        %372 = vdwg.mxu0
        %375 = vrot.lane.b32.xlu0 %v365, 16
        %v376 = vpop.permute.xlu0 %375
        %377 = vrot.lane.b32.xlu0 %v370, 16
        %v378 = vpop.permute.xlu0 %377
        %vm381 = vcmask 130048
        %v382 = vsel %vm381, %v355, %v376
        %v383 = vsel %vm381, %v360, %v378
        %v385 = vsel %vm275, %v382, 0
        %v388 = vsel %vm275, %v383, 0
        %390 = vmatprep.subr.mxu0 0.0
        %391 = vmatpush1.msra.mxu0 %v271
        %392 = vmatprep.subr.mxu0 0.0
        %393 = vmatpush1.msra.mxu0 %v272
        %394 = vmatprep.subr.mxu0 0.0
        %395 = vmatpush1.msra.mxu0 %v273
        %396 = vmatprep.subr.mxu0 0.0
        %397 = vmatpush1.msra.mxu0 %v274
        %398 = vmatprep.subr.mxu0 0.0
        %399 = vmatpush1.msra.mxu0 0.0
        %400 = vmatprep.subr.mxu0 0.0
        %401 = vmatpush1.msra.mxu0 0.0
        %402 = vmatprep.subr.mxu0 0.0
        %403 = vmatpush1.msra.mxu0 0.0
        %404 = vmatprep.subr.mxu0 0.0
        %405 = vmatpush1.msra.mxu0 0.0
        %406 = vmatprep.subr.mxu0 0.0
        %407 = vmatpush1.msra.mxu0 0.0
        %408 = vmatprep.subr.mxu0 0.0
        %409 = vmatpush1.msra.mxu0 0.0
        %410 = vmatprep.subr.mxu0 0.0
        %411 = vmatpush1.msra.mxu0 0.0
        %412 = vmatprep.subr.mxu0 0.0
        %413 = vmatpush1.msra.mxu0 0.0
        %414 = vmatprep.subr.mxu0 0.0
        %415 = vmatpush1.msra.mxu0 0.0
        %416 = vmatprep.subr.mxu0 0.0
        %417 = vmatpush1.msra.mxu0 0.0
        %418 = vmatprep.subr.mxu0 0.0
        %419 = vmatpush1.msra.mxu0 0.0
        %420 = vmatprep.subr.mxu0 0.0
        %421 = vmatpush1.msra.mxu0 0.0
        %422 = vmatprep.subr.mxu0 0.0
        %423 = vmatpush1.msra.mxu0 0.0
        %424 = vmatprep.subr.mxu0 0.0
        %425 = vmatpush1.msra.mxu0 0.0
        %426 = vmatprep.subr.mxu0 0.0
        %427 = vmatpush1.msra.mxu0 0.0
        %428 = vmatprep.subr.mxu0 0.0
        %429 = vmatpush1.msra.mxu0 0.0
        %430 = vmatprep.subr.mxu0 0.0
        %431 = vmatpush1.msra.mxu0 0.0
        %432 = vmatprep.subr.mxu0 0.0
        %433 = vmatpush1.msra.mxu0 0.0
        %434 = vmatprep.subr.mxu0 0.0
        %435 = vmatpush1.msra.mxu0 0.0
        %436 = vmatprep.subr.mxu0 0.0
        %437 = vmatpush1.msra.mxu0 0.0
        %438 = vmatprep.subr.mxu0 0.0
        %439 = vmatpush1.msra.mxu0 0.0
        %440 = vmatprep.subr.mxu0 0.0
        %441 = vmatpush1.msra.mxu0 0.0
        %442 = vmatprep.subr.mxu0 0.0
        %443 = vmatpush1.msra.mxu0 0.0
        %444 = vmatprep.subr.mxu0 0.0
        %445 = vmatpush1.msra.mxu0 0.0
        %446 = vmatprep.subr.mxu0 0.0
        %447 = vmatpush1.msra.mxu0 0.0
        %448 = vmatprep.subr.mxu0 0.0
        %449 = vmatpush1.msra.mxu0 0.0
        %450 = vmatprep.subr.mxu0 0.0
        %451 = vmatpush1.msra.mxu0 0.0
        %452 = vmatprep.subr.mxu0 0.0
        %453 = vmatpush1.msra.mxu0 0.0
        %454 = vmatprep.mubr.f32.mxu0 0.0
        %455 = vmatmul.mubr.f32.gmra.mrb[0].mxu0 %v385
        %v456 = vpop.f32.mrb[0].mxu0
        %v457 = vadd.f32 0.0, %v456
        %v458 = vpop.f32.mrb[0].mxu0
        %459 = vmatprep.mubr.f32.mxu0 0.0
        %460 = vmatmul.mubr.f32.gmra.mrb[0].mxu0 %v388
        %v461 = vpop.f32.mrb[0].mxu0
        %v462 = vadd.f32 0.0, %v461
        %v463 = vpop.f32.mrb[0].mxu0
        %464 = vdwg.mxu0
        %v465 = vmul.f32 %v457, %v260
        %v466 = vmul.f32 %v462, %v261
        %469 = vrot.lane.b32.xlu0 %v260, 16
        %v470 = vpop.permute.xlu0 %469
        %471 = vrot.lane.b32.xlu0 %v261, 16
        %v472 = vpop.permute.xlu0 %471
        %v475 = vmul.f32 %v457, %v470
        %v476 = vmul.f32 %v462, %v472
        %477 = vst.msk [vmem:[%s259] sm:$0xff] %vm381, %v465
        %478 = vst.msk [vmem:[%s259 + $0x8] sm:$0xff] %vm381, %v466
        %481 = vrot.lane.b32.xlu0 %v475, 112
        %v482 = vpop.permute.xlu0 %481
        %483 = vrot.lane.b32.xlu0 %v476, 112
        %v484 = vpop.permute.xlu0 %483
        %s487 = scalar_lea.vmem %s259, 16 [#allocation10]
        %488 = vst.msk [vmem:[%s487] sm:$0xff] %vm381, %v482
        %489 = vst.msk [vmem:[%s487 + $0x8] sm:$0xff] %vm381, %v484
        %s490 = sand.u32 %s120, 1
        %s491 = scalar_lea.sflag [#allocation4], %s490
        %s492 = sand.u32 %s120, 1
        %s493 = smul.addr %s492, 32
        %s494 = scalar_lea.vmem [#allocation10], %s493
        // Predicated region
        $region53: #{tpu_custom_call.1} parent=35 // pred_check
          %p495 = pneg %p130
        $region54: #{tpu_custom_call.1} parent=35 // pred_check_branch
          %497 = sbr.rel (%p495) target = $region56
        $region55: #{tpu_custom_call.1} parent=35 // pred_region
          %s499 = ssub.s32 512, 512
          %500 = vsyncadd %s491, %s499
          %s501 = smul.addr %s23, 4
          %s502 = smul.addr %s501, 128
          %s503 = scalar_lea.hbm %s4, %s502
          %s504 = sshll.u32 %s494, 4
          %s505 = int_to_ptr.vmem [resolvable:$true] %s504
          %510 = dma.vmem_to_hbm [thread:$0]  %s505, 512, %s503, %s491, 128, 128, 8
        $region56: #{tpu_custom_call.1} parent=35 // pred_fallthru
          _
      $region36: #{tpu_custom_call.1} parent=5 // pred_fallthru
        _
      %p511 = scmp.le.s32.totalorder 2, %s18
      // Predicated region
      $region57: #{tpu_custom_call.1} parent=5 // pred_check
        %p512 = pneg %p511
      $region58: #{tpu_custom_call.1} parent=5 // pred_check_branch
        %514 = sbr.rel (%p512) target = $region60
      $region59: #{tpu_custom_call.1} parent=5 // pred_region
        %s515 = ssub.s32 %s18, 2
        // Predicated region
        $region61: #{tpu_custom_call.1} parent=59 // pred_check
          %p516 = pneg %p136
        $region62: #{tpu_custom_call.1} parent=59 // pred_check_branch
          %518 = sbr.rel (%p516) target = $region64
        $region63: #{tpu_custom_call.1} parent=59 // pred_region
          %s519 = sand.u32 %s121, 1
          %s520 = scalar_lea.sflag [#allocation4], %s519
          %s521 = sand.u32 %s121, 1
          %s522 = smul.addr %s521, 32
          %s523 = scalar_lea.vmem [#allocation10], %s522
          %524 = dma.done %s520, 512
        $region64: #{tpu_custom_call.1} parent=59 // pred_fallthru
          _
      $region60: #{tpu_custom_call.1} parent=5 // pred_fallthru
        _
    $region6: #{tpu_custom_call.1} parent=1 // loop_footer
      %s22 = sadd.s32 1, %s18
    $region7: #{tpu_custom_call.1} parent=1 // loop_footer_branch
      %17 = sbr.rel target = $region3
    $region8: #{tpu_custom_call.1} parent=1 // loop_exit
      _
    %525 = vsyncpa [#allocation3], 1
    %s526 = scalar_lea.sflag [#allocation3], 1
    %527 = vsyncpa %s526, 1
    %528 = vsyncpa [#allocation6], 1
    %529 = vsyncpa [#allocation9], 1
    %530 = vsyncpa [#allocation4], 1
    %s531 = scalar_lea.sflag [#allocation4], 1
    %532 = vsyncpa %s531, 1

</llo_original>
